<compile_context>
chip_gen: v6e
topology: v6e:2x2x1
jax: 0.10.0
libtpu: 0.0.40
codegen_flags: <defaults>
</compile_context>

<pallas_src>
import functools

import jax
import jax.numpy as jnp
from jax import lax
from jax.experimental import pallas as pl
from jax.experimental.pallas import tpu as pltpu  # noqa: F401  (TPU backend)


def downstream_kernel(x_ref, gamma_ref, beta_ref, w1_ref, b1_ref, w2_ref,
                      b2_ref, o_ref, *, use_bf16_matmul: bool):
    eps = 1e-5
    x = x_ref[...].astype(jnp.float32)                        # [N, D]
    n = x.shape[0]
    inv_n = 1.0 / float(n)

    # ---- BatchNorm1d statistics (training mode: batch stats, biased var) ----
    # Single sweep over x: sum and sum-of-squares together.
    s = jnp.sum(x, axis=0, keepdims=True)                     # [1, D]
    ss = jnp.sum(x * x, axis=0, keepdims=True)                # [1, D]
    mean = s * inv_n
    var = ss * inv_n - mean * mean                            # biased variance
    # Fold gamma/beta into a single per-feature scale/shift.
    scale = gamma_ref[...] * lax.rsqrt(var + eps)             # [1, D]  (EUP rsqrt)
    shift = beta_ref[...] - mean * scale                      # [1, D]

    # ---- Fold BN into fc1 (exact algebraic rewrite) ----
    #   (x * scale + shift) @ W1^T + b1
    # =  x @ (W1 * scale)^T + (b1 + shift @ W1^T)
    dn = (((1,), (1,)), ((), ()))                             # contract torch [out, in]
    w1 = w1_ref[...]                                          # [H, D] f32
    w1_eff = w1 * scale                                       # [H, D] (broadcast over rows)
    b1_eff = b1_ref[...] + lax.dot_general(                   # [1, H] f32 (tiny matvec)
        shift, w1, dimension_numbers=dn, preferred_element_type=jnp.float32)

    mm_dtype = jnp.bfloat16 if use_bf16_matmul else jnp.float32

    # ---- fc1 + ReLU ----
    h1 = lax.dot_general(
        x.astype(mm_dtype), w1_eff.astype(mm_dtype),
        dimension_numbers=dn, preferred_element_type=jnp.float32,
    ) + b1_eff
    h1 = jnp.maximum(h1, 0.0)                                 # [N, H] f32

    # ---- fc2 + ReLU ----
    h2 = lax.dot_general(
        h1.astype(mm_dtype), w2_ref[...].astype(mm_dtype),
        dimension_numbers=dn, preferred_element_type=jnp.float32,
    ) + b2_ref[...]
    h2 = jnp.maximum(h2, 0.0)                                 # [N, H] f32

    o_ref[...] = h2.astype(o_ref.dtype)


def downstream_model(x, gamma, beta, w1, b1, w2, b2, *, use_bf16_matmul=True):
    """x: [N, D]; gamma/beta: [D]; w1: [H, D] (torch layout); b1: [H];
    w2: [H, H] (torch layout); b2: [H]."""
    N, D = x.shape
    H = w1.shape[0]

    # Only cheap metadata reshapes in the wrapper (no transposes, no copies).
    gamma2 = gamma.reshape(1, D)
    beta2 = beta.reshape(1, D)
    b1_2 = b1.reshape(1, H)
    b2_2 = b2.reshape(1, H)

    full = lambda shape: pl.BlockSpec(shape, lambda: (0,) * len(shape))

    itemsize = 4
    cost = pl.CostEstimate(
        flops=2 * N * D * H + 2 * N * H * H + 2 * D * H + 6 * N * D + 4 * H * D,
        transcendentals=D,  # rsqrt per feature
        bytes_accessed=itemsize * (N * D + 2 * D + H * D + H + H * H + H + N * H),
    )

    kernel = functools.partial(downstream_kernel, use_bf16_matmul=use_bf16_matmul)

    return pl.pallas_call(
        kernel,
        out_shape=jax.ShapeDtypeStruct((N, H), jnp.float32),
        grid=(),  # single program: whole problem is VMEM-resident at these sizes
        in_specs=[
            full((N, D)),   # x
            full((1, D)),   # gamma
            full((1, D)),   # beta
            full((H, D)),   # w1 (torch layout, no transpose)
            full((1, H)),   # b1
            full((H, H)),   # w2 (torch layout, no transpose)
            full((1, H)),   # b2
        ],
        out_specs=full((N, H)),
        cost_estimate=cost,
    )(x, gamma2, beta2, w1, b1_2, w2, b2_2)


def reference(x, gamma, beta, w1, b1, w2, b2):
    eps = 1e-5
    mean = jnp.mean(x, axis=0, keepdims=True)
    var = jnp.mean((x - mean) ** 2, axis=0, keepdims=True)
    xb = (x - mean) / jnp.sqrt(var + eps) * gamma + beta
    h1 = jnp.maximum(xb @ w1.T + b1, 0.0)
    return jnp.maximum(h1 @ w2.T + b2, 0.0)


if __name__ == "__main__":
    # Small, deterministic shapes: batch=8, input_size=32, hidden_size=32
    N, D, H = 8, 32, 32
    key = jax.random.PRNGKey(0)
    kx, kw1, kb1, kw2, kb2 = jax.random.split(key, 5)

    x = jax.random.normal(kx, (N, D), dtype=jnp.float32)

    # BatchNorm1d affine params (PyTorch default init: gamma=1, beta=0)
    gamma = jnp.ones((D,), dtype=jnp.float32)
    beta = jnp.zeros((D,), dtype=jnp.float32)

    # Linear params, torch layout [out, in], uniform(-1/sqrt(in), 1/sqrt(in))
    bound1 = 1.0 / jnp.sqrt(D)
    w1 = jax.random.uniform(kw1, (H, D), minval=-bound1, maxval=bound1, dtype=jnp.float32)
    b1 = jax.random.uniform(kb1, (H,), minval=-bound1, maxval=bound1, dtype=jnp.float32)
    bound2 = 1.0 / jnp.sqrt(H)
    w2 = jax.random.uniform(kw2, (H, H), minval=-bound2, maxval=bound2, dtype=jnp.float32)
    b2 = jax.random.uniform(kb2, (H,), minval=-bound2, maxval=bound2, dtype=jnp.float32)

    ref = reference(x, gamma, beta, w1, b1, w2, b2)

    # f32-matmul path: numerically tight vs reference.
    out_f32 = downstream_model(x, gamma, beta, w1, b1, w2, b2, use_bf16_matmul=False)
    out_f32 = jax.block_until_ready(out_f32)
    assert out_f32.shape == (N, H)
    assert jnp.allclose(out_f32, ref, atol=1e-4, rtol=1e-4), "f32 path mismatch vs reference"

    # bf16-matmul path (default, MXU-native on v6e/v7x): looser tolerance.
    out = downstream_model(x, gamma, beta, w1, b1, w2, b2)
    out = jax.block_until_ready(out)
    assert out.shape == (N, H)
    assert jnp.allclose(out, ref, atol=3e-2, rtol=3e-2), "bf16 path mismatch vs reference"

    print("KERNEL_OK")
</pallas_src>

<mosaic_0001>
module attributes {stable_mosaic.version = 11 : i64} {
  func.func @downstream_kernel(%arg0: memref<8x32xf32, #tpu.memory_space<vmem>>, %arg1: memref<1x32xf32, #tpu.memory_space<vmem>>, %arg2: memref<1x32xf32, #tpu.memory_space<vmem>>, %arg3: memref<32x32xf32, #tpu.memory_space<vmem>>, %arg4: memref<1x32xf32, #tpu.memory_space<vmem>>, %arg5: memref<32x32xf32, #tpu.memory_space<vmem>>, %arg6: memref<1x32xf32, #tpu.memory_space<vmem>>, %arg7: memref<8x32xf32, #tpu.memory_space<vmem>>) attributes {dimension_semantics = [], scalar_prefetch = 0 : i64, scratch_operands = 0 : i64, tpu.core_type = #tpu.core_type<tc>} {
    %c0 = arith.constant 0 : index
    %c0_0 = arith.constant 0 : index
    %0 = vector.load %arg0[%c0, %c0_0] : memref<8x32xf32, #tpu.memory_space<vmem>>, vector<8x32xf32>
    %cst = arith.constant dense<0.000000e+00> : vector<32xf32>
    %1 = vector.multi_reduction <add>, %0, %cst [0] : vector<8x32xf32> to vector<32xf32>
    %2 = vector.shape_cast %1 : vector<32xf32> to vector<1x32xf32>
    %3 = arith.mulf %0, %0 : vector<8x32xf32>
    %cst_1 = arith.constant dense<0.000000e+00> : vector<32xf32>
    %4 = vector.multi_reduction <add>, %3, %cst_1 [0] : vector<8x32xf32> to vector<32xf32>
    %5 = vector.shape_cast %4 : vector<32xf32> to vector<1x32xf32>
    %cst_2 = arith.constant 1.250000e-01 : f32
    %6 = vector.broadcast %cst_2 : f32 to vector<1x32xf32>
    %7 = arith.mulf %2, %6 : vector<1x32xf32>
    %cst_3 = arith.constant 1.250000e-01 : f32
    %8 = vector.broadcast %cst_3 : f32 to vector<1x32xf32>
    %9 = arith.mulf %5, %8 : vector<1x32xf32>
    %10 = arith.mulf %7, %7 : vector<1x32xf32>
    %11 = arith.subf %9, %10 : vector<1x32xf32>
    %c0_4 = arith.constant 0 : index
    %c0_5 = arith.constant 0 : index
    %12 = vector.load %arg1[%c0_4, %c0_5] : memref<1x32xf32, #tpu.memory_space<vmem>>, vector<1x32xf32>
    %cst_6 = arith.constant 9.99999974E-6 : f32
    %13 = vector.broadcast %cst_6 : f32 to vector<1x32xf32>
    %14 = arith.addf %11, %13 : vector<1x32xf32>
    %15 = math.rsqrt %14 : vector<1x32xf32>
    %16 = arith.mulf %12, %15 : vector<1x32xf32>
    %c0_7 = arith.constant 0 : index
    %c0_8 = arith.constant 0 : index
    %17 = vector.load %arg2[%c0_7, %c0_8] : memref<1x32xf32, #tpu.memory_space<vmem>>, vector<1x32xf32>
    %18 = arith.mulf %7, %16 : vector<1x32xf32>
    %19 = arith.subf %17, %18 : vector<1x32xf32>
    %c0_9 = arith.constant 0 : index
    %c0_10 = arith.constant 0 : index
    %20 = vector.load %arg3[%c0_9, %c0_10] : memref<32x32xf32, #tpu.memory_space<vmem>>, vector<32x32xf32>
    %21 = vector.broadcast %16 : vector<1x32xf32> to vector<32x32xf32>
    %22 = arith.mulf %20, %21 : vector<32x32xf32>
    %c0_11 = arith.constant 0 : index
    %c0_12 = arith.constant 0 : index
    %23 = vector.load %arg4[%c0_11, %c0_12] : memref<1x32xf32, #tpu.memory_space<vmem>>, vector<1x32xf32>
    %cst_13 = arith.constant dense<0.000000e+00> : vector<1x32xf32>
    %24 = tpu.matmul %19, %20, %cst_13 {dimension_numbers = #tpu.dot_dimension_numbers<[1], [1], [0], [0], [0, 0, 1, 0], [], []>} : vector<1x32xf32>, vector<32x32xf32>, vector<1x32xf32> -> vector<1x32xf32>
    %25 = arith.addf %23, %24 : vector<1x32xf32>
    %cst_14 = arith.constant dense<0.000000e+00> : vector<8x32xf32>
    %26 = tpu.matmul %0, %22, %cst_14 {dimension_numbers = #tpu.dot_dimension_numbers<[1], [1], [0], [0], [0, 0, 1, 0], [], []>} : vector<8x32xf32>, vector<32x32xf32>, vector<8x32xf32> -> vector<8x32xf32>
    %27 = vector.broadcast %25 : vector<1x32xf32> to vector<8x32xf32>
    %28 = arith.addf %26, %27 : vector<8x32xf32>
    %cst_15 = arith.constant 0.000000e+00 : f32
    %29 = vector.broadcast %cst_15 : f32 to vector<8x32xf32>
    %30 = arith.maximumf %28, %29 : vector<8x32xf32>
    %c0_16 = arith.constant 0 : index
    %c0_17 = arith.constant 0 : index
    %31 = vector.load %arg5[%c0_16, %c0_17] : memref<32x32xf32, #tpu.memory_space<vmem>>, vector<32x32xf32>
    %cst_18 = arith.constant dense<0.000000e+00> : vector<8x32xf32>
    %32 = tpu.matmul %30, %31, %cst_18 {dimension_numbers = #tpu.dot_dimension_numbers<[1], [1], [0], [0], [0, 0, 1, 0], [], []>} : vector<8x32xf32>, vector<32x32xf32>, vector<8x32xf32> -> vector<8x32xf32>
    %c0_19 = arith.constant 0 : index
    %c0_20 = arith.constant 0 : index
    %33 = vector.load %arg6[%c0_19, %c0_20] : memref<1x32xf32, #tpu.memory_space<vmem>>, vector<1x32xf32>
    %34 = vector.broadcast %33 : vector<1x32xf32> to vector<8x32xf32>
    %35 = arith.addf %32, %34 : vector<8x32xf32>
    %cst_21 = arith.constant 0.000000e+00 : f32
    %36 = vector.broadcast %cst_21 : f32 to vector<8x32xf32>
    %37 = arith.maximumf %35, %36 : vector<8x32xf32>
    %c0_22 = arith.constant 0 : index
    %c0_23 = arith.constant 0 : index
    %38 = vector.load %arg7[%c0_22, %c0_23] : memref<8x32xf32, #tpu.memory_space<vmem>>, vector<8x32xf32>
    tpu.vector_store %arg7[%c0_22, %c0_23], %37 {strides = array<i32>} : memref<8x32xf32, #tpu.memory_space<vmem>>, vector<8x32xf32>,
    return
  }
}

</mosaic_0001>

<llo_original>
// kernel: tpu_custom_call.1
$region0: #{tpu_custom_call.1}
  #allocation0 [shape = 'u32[]', space=smem, size = 0x4, offset = 0x4, fixed_abs, tag = 'smem constant byte address 0x4 - core index']
  #allocation1 [shape = 'u32[144,128]{1,0:T(1,128)}', space=vmem, size = 0x12000, scoped, tag = 'internal scratch']
  %s0 = inlined_call_operand.hbm [shape: f32[8,32], index: 0, kind: input, shape index: {}]
  %s1 = inlined_call_operand.vmem [shape: f32[1,32], index: 1, kind: input, shape index: {}]
  %s2 = inlined_call_operand.vmem [shape: f32[1,32], index: 2, kind: input, shape index: {}]
  %s3 = inlined_call_operand.hbm [shape: f32[32,32], index: 3, kind: input, shape index: {}]
  %s4 = inlined_call_operand.vmem [shape: f32[1,32], index: 4, kind: input, shape index: {}]
  %s5 = inlined_call_operand.hbm [shape: f32[32,32], index: 5, kind: input, shape index: {}]
  %s6 = inlined_call_operand.vmem [shape: f32[1,32], index: 6, kind: input, shape index: {}]
  %s7 = inlined_call_operand.hbm [shape: f32[8,32], index: 7, kind: output, shape index: {}]
  %s8 = sld [smem:[#allocation0]]
  $region50: #{tpu_custom_call.1} parent=0
    _
  %s10 = ssub.s32 1, %s8
  %s11 = scalar_select 0, %s10, %s8
  $region1: #{tpu_custom_call.1} parent=0
    #allocation2 [shape = 'u8[4096]{0}', space=vmem, size = 0x1000, scoped, tag = 'input window, operand 0, single buffered']
    #allocation3 [shape = 's32[1]{0}', space=sflag, size = 0x4, scoped, tag = 'scoped memory for tpu_custom_call.1']
    #allocation4 [shape = 's32[1]{0}', space=sflag, size = 0x4, scoped, tag = 'scoped memory for tpu_custom_call.1']
    #allocation5 [shape = 'u8[16384]{0}', space=vmem, size = 0x4000, scoped, tag = 'input window, operand 3, single buffered']
    #allocation6 [shape = 's32[1]{0}', space=sflag, size = 0x4, scoped, tag = 'scoped memory for tpu_custom_call.1']
    #allocation7 [shape = 'u8[16384]{0}', space=vmem, size = 0x4000, scoped, tag = 'input window, operand 5, single buffered']
    #allocation8 [shape = 'u8[4096]{0}', space=vmem, size = 0x1000, scoped, tag = 'output window, operand 0, single buffered']
    %12 = vsyncpa [#allocation3], 0
    %13 = vsyncpa [#allocation6], 0
    %14 = vsyncpa [#allocation4], 0
    // Predicated region
    $region2: #{tpu_custom_call.1} parent=1 // pred_check
      _
    $region3: #{tpu_custom_call.1} parent=1 // pred_check_branch
      %16 = sbr.rel (0) target = $region5
    $region4: #{tpu_custom_call.1} parent=1 // pred_region
      %s18 = ssub.s32 128, 128
      %19 = vsyncadd [#allocation3], %s18
      %s21 = sshll.u32 [#allocation2], 4
      %s22 = int_to_ptr.vmem [resolvable:$true] %s21
      %24 = dma.hbm_to_vmem [thread:$0]  %s0, 128, %s22, [#allocation3]
    $region5: #{tpu_custom_call.1} parent=1 // pred_fallthru
      _
    // Predicated region
    $region6: #{tpu_custom_call.1} parent=1 // pred_check
      _
    $region7: #{tpu_custom_call.1} parent=1 // pred_check_branch
      %26 = sbr.rel (0) target = $region9
    $region8: #{tpu_custom_call.1} parent=1 // pred_region
      _
    $region9: #{tpu_custom_call.1} parent=1 // pred_fallthru
      _
    // Predicated region
    $region10: #{tpu_custom_call.1} parent=1 // pred_check
      _
    $region11: #{tpu_custom_call.1} parent=1 // pred_check_branch
      %28 = sbr.rel (0) target = $region13
    $region12: #{tpu_custom_call.1} parent=1 // pred_region
      _
    $region13: #{tpu_custom_call.1} parent=1 // pred_fallthru
      _
    // Predicated region
    $region14: #{tpu_custom_call.1} parent=1 // pred_check
      _
    $region15: #{tpu_custom_call.1} parent=1 // pred_check_branch
      %30 = sbr.rel (0) target = $region17
    $region16: #{tpu_custom_call.1} parent=1 // pred_region
      %s32 = ssub.s32 512, 512
      %33 = vsyncadd [#allocation6], %s32
      %s34 = sshll.u32 [#allocation5], 4
      %s35 = int_to_ptr.vmem [resolvable:$true] %s34
      %40 = dma.hbm_to_vmem [thread:$0]  %s3, 512, %s35, [#allocation6], 128, 128, 8
    $region17: #{tpu_custom_call.1} parent=1 // pred_fallthru
      _
    // Predicated region
    $region18: #{tpu_custom_call.1} parent=1 // pred_check
      _
    $region19: #{tpu_custom_call.1} parent=1 // pred_check_branch
      %42 = sbr.rel (0) target = $region21
    $region20: #{tpu_custom_call.1} parent=1 // pred_region
      _
    $region21: #{tpu_custom_call.1} parent=1 // pred_fallthru
      _
    // Predicated region
    $region22: #{tpu_custom_call.1} parent=1 // pred_check
      _
    $region23: #{tpu_custom_call.1} parent=1 // pred_check_branch
      %44 = sbr.rel (0) target = $region25
    $region24: #{tpu_custom_call.1} parent=1 // pred_region
      %s46 = ssub.s32 512, 512
      %47 = vsyncadd [#allocation6], %s46
      %s48 = sshll.u32 [#allocation7], 4
      %s49 = int_to_ptr.vmem [resolvable:$true] %s48
      %54 = dma.hbm_to_vmem [thread:$0]  %s5, 512, %s49, [#allocation6], 128, 128, 8
    $region25: #{tpu_custom_call.1} parent=1 // pred_fallthru
      _
    // Predicated region
    $region26: #{tpu_custom_call.1} parent=1 // pred_check
      _
    $region27: #{tpu_custom_call.1} parent=1 // pred_check_branch
      %56 = sbr.rel (0) target = $region29
    $region28: #{tpu_custom_call.1} parent=1 // pred_region
      _
    $region29: #{tpu_custom_call.1} parent=1 // pred_fallthru
      _
    // Predicated region
    $region30: #{tpu_custom_call.1} parent=1 // pred_check
      _
    $region31: #{tpu_custom_call.1} parent=1 // pred_check_branch
      %58 = sbr.rel (0) target = $region33
    $region32: #{tpu_custom_call.1} parent=1 // pred_region
      %59 = dma.done [#allocation3], 128
    $region33: #{tpu_custom_call.1} parent=1 // pred_fallthru
      _
    // Predicated region
    $region34: #{tpu_custom_call.1} parent=1 // pred_check
      _
    $region35: #{tpu_custom_call.1} parent=1 // pred_check_branch
      %61 = sbr.rel (0) target = $region37
    $region36: #{tpu_custom_call.1} parent=1 // pred_region
      %62 = dma.done [#allocation6], 512
    $region37: #{tpu_custom_call.1} parent=1 // pred_fallthru
      _
    // Predicated region
    $region38: #{tpu_custom_call.1} parent=1 // pred_check
      _
    $region39: #{tpu_custom_call.1} parent=1 // pred_check_branch
      %64 = sbr.rel (0) target = $region41
    $region40: #{tpu_custom_call.1} parent=1 // pred_region
      %65 = dma.done [#allocation6], 512
    $region41: #{tpu_custom_call.1} parent=1 // pred_fallthru
      _
    %v66 = vld [vmem:[#allocation2] sm:$0xff]
    %vm67 = vcmask 261120
    %v68 = vsel %vm67, %v66, 0.0
    %v69 = vrot.slane %v68, 4
    %v70 = vadd.f32 %v68, %v69
    %v71 = vrot.slane %v70, 2
    %v72 = vadd.f32 %v70, %v71
    %v73 = vrot.slane %v72, 1
    %v74 = vadd.f32 %v72, %v73
    %v75 = vmul.f32 %v66, %v66
    %v76 = vsel %vm67, %v75, 0.0
    %v77 = vrot.slane %v76, 4
    %v78 = vadd.f32 %v76, %v77
    %v79 = vrot.slane %v78, 2
    %v80 = vadd.f32 %v78, %v79
    %v81 = vrot.slane %v80, 1
    %v82 = vadd.f32 %v80, %v81
    %v83 = vmul.f32 %v74, 0.125
    %v84 = vmul.f32 %v82, 0.125
    %v85 = vmul.f32 %v83, %v83
    %v86 = vsub.f32 %v84, %v85
    %v87 = vld [vmem:[%s1] sm:$0x1]
    %v88 = vadd.f32 %v86, 1e-05
    %v89 = vrsqrt.pop %v88
    %v90 = vmul.f32 %v87, %v89
    %v91 = vld [vmem:[%s2] sm:$0x1]
    %v92 = vmul.f32 %v83, %v90
    %v93 = vsub.f32 %v91, %v92
    %v94 = vld [vmem:[#allocation5] sm:$0xff]
    %v95 = vld [vmem:[#allocation5 + $0x8] sm:$0xff]
    %v96 = vld [vmem:[#allocation5 + $0x10] sm:$0xff]
    %v97 = vld [vmem:[#allocation5 + $0x18] sm:$0xff]
    %v99 = vlaneseq
    %v100 = vshrl.u32 %v99, 7
    %v101 = vsub.s32 0, %v100
    %v102 = vrot.slane %v90, %v101
    %v104 = vmul.f32 %v94, %v102
    %v105 = vmul.f32 %v95, %v102
    %v106 = vmul.f32 %v96, %v102
    %v107 = vmul.f32 %v97, %v102
    %v108 = vld [vmem:[%s4] sm:$0x1]
    %v110 = vsel %vm67, %v93, 0
    %v113 = vsel %vm67, %v94, 0
    %v116 = vsel %vm67, %v95, 0
    %v119 = vsel %vm67, %v96, 0
    %v122 = vsel %vm67, %v97, 0
    %124 = vmatprep.subr.mxu0 0.0
    %125 = vmatpush1.xpose.msra.mxu0 0.0
    %126 = vmatprep.subr.mxu0 0.0
    %127 = vmatpush1.xpose.msra.mxu0 0.0
    %128 = vmatprep.subr.mxu0 0.0
    %129 = vmatpush1.xpose.msra.mxu0 0.0
    %130 = vmatprep.subr.mxu0 0.0
    %131 = vmatpush1.xpose.msra.mxu0 0.0
    %132 = vmatprep.subr.mxu0 0.0
    %133 = vmatpush1.xpose.msra.mxu0 0.0
    %134 = vmatprep.subr.mxu0 0.0
    %135 = vmatpush1.xpose.msra.mxu0 0.0
    %136 = vmatprep.subr.mxu0 0.0
    %137 = vmatpush1.xpose.msra.mxu0 0.0
    %138 = vmatprep.subr.mxu0 0.0
    %139 = vmatpush1.xpose.msra.mxu0 0.0
    %140 = vmatprep.subr.mxu0 0.0
    %141 = vmatpush1.xpose.msra.mxu0 0.0
    %142 = vmatprep.subr.mxu0 0.0
    %143 = vmatpush1.xpose.msra.mxu0 0.0
    %144 = vmatprep.subr.mxu0 0.0
    %145 = vmatpush1.xpose.msra.mxu0 0.0
    %146 = vmatprep.subr.mxu0 0.0
    %147 = vmatpush1.xpose.msra.mxu0 0.0
    %148 = vmatprep.subr.mxu0 0.0
    %149 = vmatpush1.xpose.msra.mxu0 %v122
    %150 = vmatprep.subr.mxu0 0.0
    %151 = vmatpush1.xpose.msra.mxu0 %v119
    %152 = vmatprep.subr.mxu0 0.0
    %153 = vmatpush1.xpose.msra.mxu0 %v116
    %154 = vmatprep.subr.mxu0 0.0
    %155 = vmatpush1.xpose.msra.mxu0 %v113
    %156 = vmatprep.subr.mxu0 0.0
    %157 = vmatpush2.xpose.msra.mxu0 0.0
    %158 = vmatprep.subr.mxu0 0.0
    %159 = vmatpush2.xpose.msra.mxu0 0.0
    %160 = vmatprep.subr.mxu0 0.0
    %161 = vmatpush2.xpose.msra.mxu0 0.0
    %162 = vmatprep.subr.mxu0 0.0
    %163 = vmatpush2.xpose.msra.mxu0 0.0
    %164 = vmatprep.subr.mxu0 0.0
    %165 = vmatpush2.xpose.msra.mxu0 0.0
    %166 = vmatprep.subr.mxu0 0.0
    %167 = vmatpush2.xpose.msra.mxu0 0.0
    %168 = vmatprep.subr.mxu0 0.0
    %169 = vmatpush2.xpose.msra.mxu0 0.0
    %170 = vmatprep.subr.mxu0 0.0
    %171 = vmatpush2.xpose.msra.mxu0 0.0
    %172 = vmatprep.subr.mxu0 0.0
    %173 = vmatpush2.xpose.msra.mxu0 0.0
    %174 = vmatprep.subr.mxu0 0.0
    %175 = vmatpush2.xpose.msra.mxu0 0.0
    %176 = vmatprep.subr.mxu0 0.0
    %177 = vmatpush2.xpose.msra.mxu0 0.0
    %178 = vmatprep.subr.mxu0 0.0
    %179 = vmatpush2.xpose.msra.mxu0 0.0
    %180 = vmatprep.subr.mxu0 0.0
    %181 = vmatpush2.xpose.msra.mxu0 0.0
    %182 = vmatprep.subr.mxu0 0.0
    %183 = vmatpush2.xpose.msra.mxu0 0.0
    %184 = vmatprep.subr.mxu0 0.0
    %185 = vmatpush2.xpose.msra.mxu0 0.0
    %186 = vmatprep.subr.mxu0 0.0
    %187 = vmatpush2.xpose.msra.mxu0 0.0
    %188 = vmatprep.mubr.f32.mxu0 0.0
    %189 = vmatmul.mubr.f32.gmra.mxu0 %v110
    %v190 = vpop.f32.mrf.mxu0
    %v191 = vadd.f32 0.0, %v190
    %v192 = vpop.f32.mrf.mxu0
    %193 = vdwg.mxu0
    %v194 = vadd.f32 %v108, %v191
    %v196 = vlaneseq
    %v197 = vshrl.u32 %v196, 7
    %v198 = vsub.s32 0, %v197
    %v199 = vrot.slane %v194, %v198
    %v202 = vsel %vm67, %v66, 0
    %v205 = vsel %vm67, %v104, 0
    %v208 = vsel %vm67, %v105, 0
    %v211 = vsel %vm67, %v106, 0
    %v214 = vsel %vm67, %v107, 0
    %216 = vmatprep.subr.mxu0 0.0
    %217 = vmatpush1.xpose.msra.mxu0 0.0
    %218 = vmatprep.subr.mxu0 0.0
    %219 = vmatpush1.xpose.msra.mxu0 0.0
    %220 = vmatprep.subr.mxu0 0.0
    %221 = vmatpush1.xpose.msra.mxu0 0.0
    %222 = vmatprep.subr.mxu0 0.0
    %223 = vmatpush1.xpose.msra.mxu0 0.0
    %224 = vmatprep.subr.mxu0 0.0
    %225 = vmatpush1.xpose.msra.mxu0 0.0
    %226 = vmatprep.subr.mxu0 0.0
    %227 = vmatpush1.xpose.msra.mxu0 0.0
    %228 = vmatprep.subr.mxu0 0.0
    %229 = vmatpush1.xpose.msra.mxu0 0.0
    %230 = vmatprep.subr.mxu0 0.0
    %231 = vmatpush1.xpose.msra.mxu0 0.0
    %232 = vmatprep.subr.mxu0 0.0
    %233 = vmatpush1.xpose.msra.mxu0 0.0
    %234 = vmatprep.subr.mxu0 0.0
    %235 = vmatpush1.xpose.msra.mxu0 0.0
    %236 = vmatprep.subr.mxu0 0.0
    %237 = vmatpush1.xpose.msra.mxu0 0.0
    %238 = vmatprep.subr.mxu0 0.0
    %239 = vmatpush1.xpose.msra.mxu0 0.0
    %240 = vmatprep.subr.mxu0 0.0
    %241 = vmatpush1.xpose.msra.mxu0 %v214
    %242 = vmatprep.subr.mxu0 0.0
    %243 = vmatpush1.xpose.msra.mxu0 %v211
    %244 = vmatprep.subr.mxu0 0.0
    %245 = vmatpush1.xpose.msra.mxu0 %v208
    %246 = vmatprep.subr.mxu0 0.0
    %247 = vmatpush1.xpose.msra.mxu0 %v205
    %248 = vmatprep.subr.mxu0 0.0
    %249 = vmatpush2.xpose.msra.mxu0 0.0
    %250 = vmatprep.subr.mxu0 0.0
    %251 = vmatpush2.xpose.msra.mxu0 0.0
    %252 = vmatprep.subr.mxu0 0.0
    %253 = vmatpush2.xpose.msra.mxu0 0.0
    %254 = vmatprep.subr.mxu0 0.0
    %255 = vmatpush2.xpose.msra.mxu0 0.0
    %256 = vmatprep.subr.mxu0 0.0
    %257 = vmatpush2.xpose.msra.mxu0 0.0
    %258 = vmatprep.subr.mxu0 0.0
    %259 = vmatpush2.xpose.msra.mxu0 0.0
    %260 = vmatprep.subr.mxu0 0.0
    %261 = vmatpush2.xpose.msra.mxu0 0.0
    %262 = vmatprep.subr.mxu0 0.0
    %263 = vmatpush2.xpose.msra.mxu0 0.0
    %264 = vmatprep.subr.mxu0 0.0
    %265 = vmatpush2.xpose.msra.mxu0 0.0
    %266 = vmatprep.subr.mxu0 0.0
    %267 = vmatpush2.xpose.msra.mxu0 0.0
    %268 = vmatprep.subr.mxu0 0.0
    %269 = vmatpush2.xpose.msra.mxu0 0.0
    %270 = vmatprep.subr.mxu0 0.0
    %271 = vmatpush2.xpose.msra.mxu0 0.0
    %272 = vmatprep.subr.mxu0 0.0
    %273 = vmatpush2.xpose.msra.mxu0 0.0
    %274 = vmatprep.subr.mxu0 0.0
    %275 = vmatpush2.xpose.msra.mxu0 0.0
    %276 = vmatprep.subr.mxu0 0.0
    %277 = vmatpush2.xpose.msra.mxu0 0.0
    %278 = vmatprep.subr.mxu0 0.0
    %279 = vmatpush2.xpose.msra.mxu0 0.0
    %280 = vmatprep.mubr.f32.mxu0 0.0
    %281 = vmatmul.mubr.f32.gmra.mxu0 %v202
    %v282 = vpop.f32.mrf.mxu0
    %v283 = vadd.f32 %v199, %v282
    %v284 = vpop.f32.mrf.mxu0
    %285 = vdwg.mxu0
    %v286 = vmax.f32 %v283, 0.0
    %v287 = vld [vmem:[#allocation7] sm:$0xff]
    %v288 = vld [vmem:[#allocation7 + $0x8] sm:$0xff]
    %v289 = vld [vmem:[#allocation7 + $0x10] sm:$0xff]
    %v290 = vld [vmem:[#allocation7 + $0x18] sm:$0xff]
    %v291 = vld [vmem:[%s6] sm:$0x1]
    %v293 = vlaneseq
    %v294 = vshrl.u32 %v293, 7
    %v295 = vsub.s32 0, %v294
    %v296 = vrot.slane %v291, %v295
    %v299 = vsel %vm67, %v286, 0
    %v302 = vsel %vm67, %v287, 0
    %v305 = vsel %vm67, %v288, 0
    %v308 = vsel %vm67, %v289, 0
    %v311 = vsel %vm67, %v290, 0
    %313 = vmatprep.subr.mxu0 0.0
    %314 = vmatpush1.xpose.msra.mxu0 0.0
    %315 = vmatprep.subr.mxu0 0.0
    %316 = vmatpush1.xpose.msra.mxu0 0.0
    %317 = vmatprep.subr.mxu0 0.0
    %318 = vmatpush1.xpose.msra.mxu0 0.0
    %319 = vmatprep.subr.mxu0 0.0
    %320 = vmatpush1.xpose.msra.mxu0 0.0
    %321 = vmatprep.subr.mxu0 0.0
    %322 = vmatpush1.xpose.msra.mxu0 0.0
    %323 = vmatprep.subr.mxu0 0.0
    %324 = vmatpush1.xpose.msra.mxu0 0.0
    %325 = vmatprep.subr.mxu0 0.0
    %326 = vmatpush1.xpose.msra.mxu0 0.0
    %327 = vmatprep.subr.mxu0 0.0
    %328 = vmatpush1.xpose.msra.mxu0 0.0
    %329 = vmatprep.subr.mxu0 0.0
    %330 = vmatpush1.xpose.msra.mxu0 0.0
    %331 = vmatprep.subr.mxu0 0.0
    %332 = vmatpush1.xpose.msra.mxu0 0.0
    %333 = vmatprep.subr.mxu0 0.0
    %334 = vmatpush1.xpose.msra.mxu0 0.0
    %335 = vmatprep.subr.mxu0 0.0
    %336 = vmatpush1.xpose.msra.mxu0 0.0
    %337 = vmatprep.subr.mxu0 0.0
    %338 = vmatpush1.xpose.msra.mxu0 %v311
    %339 = vmatprep.subr.mxu0 0.0
    %340 = vmatpush1.xpose.msra.mxu0 %v308
    %341 = vmatprep.subr.mxu0 0.0
    %342 = vmatpush1.xpose.msra.mxu0 %v305
    %343 = vmatprep.subr.mxu0 0.0
    %344 = vmatpush1.xpose.msra.mxu0 %v302
    %345 = vmatprep.subr.mxu0 0.0
    %346 = vmatpush2.xpose.msra.mxu0 0.0
    %347 = vmatprep.subr.mxu0 0.0
    %348 = vmatpush2.xpose.msra.mxu0 0.0
    %349 = vmatprep.subr.mxu0 0.0
    %350 = vmatpush2.xpose.msra.mxu0 0.0
    %351 = vmatprep.subr.mxu0 0.0
    %352 = vmatpush2.xpose.msra.mxu0 0.0
    %353 = vmatprep.subr.mxu0 0.0
    %354 = vmatpush2.xpose.msra.mxu0 0.0
    %355 = vmatprep.subr.mxu0 0.0
    %356 = vmatpush2.xpose.msra.mxu0 0.0
    %357 = vmatprep.subr.mxu0 0.0
    %358 = vmatpush2.xpose.msra.mxu0 0.0
    %359 = vmatprep.subr.mxu0 0.0
    %360 = vmatpush2.xpose.msra.mxu0 0.0
    %361 = vmatprep.subr.mxu0 0.0
    %362 = vmatpush2.xpose.msra.mxu0 0.0
    %363 = vmatprep.subr.mxu0 0.0
    %364 = vmatpush2.xpose.msra.mxu0 0.0
    %365 = vmatprep.subr.mxu0 0.0
    %366 = vmatpush2.xpose.msra.mxu0 0.0
    %367 = vmatprep.subr.mxu0 0.0
    %368 = vmatpush2.xpose.msra.mxu0 0.0
    %369 = vmatprep.subr.mxu0 0.0
    %370 = vmatpush2.xpose.msra.mxu0 0.0
    %371 = vmatprep.subr.mxu0 0.0
    %372 = vmatpush2.xpose.msra.mxu0 0.0
    %373 = vmatprep.subr.mxu0 0.0
    %374 = vmatpush2.xpose.msra.mxu0 0.0
    %375 = vmatprep.subr.mxu0 0.0
    %376 = vmatpush2.xpose.msra.mxu0 0.0
    %377 = vmatprep.mubr.f32.mxu0 0.0
    %378 = vmatmul.mubr.f32.gmra.mxu0 %v299
    %v379 = vpop.f32.mrf.mxu0
    %v380 = vadd.f32 %v296, %v379
    %v381 = vpop.f32.mrf.mxu0
    %382 = vdwg.mxu0
    %v383 = vmax.f32 %v380, 0.0
    %384 = vst.msk [vmem:[#allocation8] sm:$0xff] %vm67, %v383
    // Predicated region
    $region42: #{tpu_custom_call.1} parent=1 // pred_check
      _
    $region43: #{tpu_custom_call.1} parent=1 // pred_check_branch
      %386 = sbr.rel (0) target = $region45
    $region44: #{tpu_custom_call.1} parent=1 // pred_region
      %s388 = ssub.s32 128, 128
      %389 = vsyncadd [#allocation4], %s388
      %s391 = sshll.u32 [#allocation8], 4
      %s392 = int_to_ptr.vmem [resolvable:$true] %s391
      %394 = dma.vmem_to_hbm [thread:$0]  %s392, 128, %s7, [#allocation4]
    $region45: #{tpu_custom_call.1} parent=1 // pred_fallthru
      _
    // Predicated region
    $region46: #{tpu_custom_call.1} parent=1 // pred_check
      _
    $region47: #{tpu_custom_call.1} parent=1 // pred_check_branch
      %396 = sbr.rel (0) target = $region49
    $region48: #{tpu_custom_call.1} parent=1 // pred_region
      %397 = dma.done [#allocation4], 128
    $region49: #{tpu_custom_call.1} parent=1 // pred_fallthru
      _
    %398 = vsyncpa [#allocation3], 1
    %399 = vsyncpa [#allocation6], 1
    %400 = vsyncpa [#allocation4], 1

</llo_original>
